<compile_context>
chip_gen: v6e
topology: v6e:2x2x1
jax: 0.10.0
libtpu: 0.0.40
codegen_flags: <defaults>
</compile_context>

<pallas_src>
import functools

import jax
import jax.numpy as jnp
from jax.experimental import pallas as pl
from jax.experimental.pallas import tpu as pltpu


def _soft_target_ce_kernel(x_ref, y_ref, loss_ref):
    """One batch-tile (tb, C): numerically-stable soft-target CE per row.

    loss = sum(-y * (shifted - lse), -1) = lse * sum(y, -1) - sum(y*shifted, -1)
    (algebraically identical to -y * log_softmax(x), without materializing
    the (tb, C) log_probs intermediate).
    """
    x = x_ref[...].astype(jnp.float32)
    y = y_ref[...].astype(jnp.float32)

    m = jnp.max(x, axis=-1, keepdims=True)
    shifted = x - m
    lse = jnp.log(jnp.sum(jnp.exp(shifted), axis=-1, keepdims=True))

    sum_y = jnp.sum(y, axis=-1, keepdims=True)
    y_dot_shifted = jnp.sum(y * shifted, axis=-1, keepdims=True)

    loss_ref[...] = (lse * sum_y - y_dot_shifted).astype(loss_ref.dtype)


def _round_up(v, m):
    return ((v + m - 1) // m) * m


def _default_block_rows(n, c, itemsize):
    """Rows per tile so one input tile is ~1 MiB (0.5-2 MiB band), multiple
    of 8 sublanes, capped at 2048 rows and at the (8-rounded) batch size."""
    target_bytes = 1 << 20
    tb = max(8, target_bytes // max(1, c * itemsize))
    tb = max(8, (int(tb) // 8) * 8)
    tb = min(tb, 2048)
    tb = min(tb, _round_up(n, 8))
    return tb


@functools.partial(jax.jit, static_argnames=("reduction", "block_rows"))
def soft_target_cross_entropy(x, y, reduction="mean", block_rows=None):
    """x: (..., C) logits, y: (..., C) soft targets. Matches the PyTorch module."""
    assert x.shape == y.shape and x.ndim >= 2
    lead_shape = x.shape[:-1]
    c = x.shape[-1]
    x2 = x.reshape(-1, c)
    y2 = y.reshape(-1, c)
    n = x2.shape[0]

    itemsize = jnp.dtype(x2.dtype).itemsize
    if block_rows is None:
        tb = _default_block_rows(n, c, itemsize)
    else:
        tb = max(8, (int(block_rows) // 8) * 8)
        tb = min(tb, _round_up(n, 8))

    num_tiles = pl.cdiv(n, tb)
    n_pad = num_tiles * tb
    if n_pad != n:
        # Zero-padded rows have y == 0 everywhere -> contribute exactly 0 loss
        # (and no NaN, since log_probs is never multiplied by y directly).
        pad = n_pad - n
        x2 = jnp.pad(x2, ((0, pad), (0, 0)))
        y2 = jnp.pad(y2, ((0, pad), (0, 0)))

    # VMEM budget: 2 inputs x 2 double-buffers x tile, plus f32 intermediates
    # and headroom. Clamp to [16 MiB, 32 MiB] so it is valid on v5e (16 MiB
    # default scoped), v6e (128 MiB phys) and v7x (64 MiB phys).
    tile_bytes = tb * c * itemsize
    vmem_limit = int(min(max(6 * tile_bytes + (2 << 20), 16 << 20), 32 << 20))

    per_row = pl.pallas_call(
        _soft_target_ce_kernel,
        out_shape=jax.ShapeDtypeStruct((n_pad, 1), jnp.float32),
        grid_spec=pltpu.PrefetchScalarGridSpec(
            num_scalar_prefetch=0,
            grid=(num_tiles,),
            in_specs=[
                pl.BlockSpec((tb, c), lambda i: (i, 0)),
                pl.BlockSpec((tb, c), lambda i: (i, 0)),
            ],
            out_specs=pl.BlockSpec((tb, 1), lambda i: (i, 0)),
        ),
        compiler_params=pltpu.CompilerParams(
            dimension_semantics=("parallel",),
            vmem_limit_bytes=vmem_limit,
        ),
    )(x2, y2)
    # TODO(synk): for very large C (10k+ vocab) add a class-dim grid axis with
    # a streaming max/LSE accumulator instead of a single (tb, C) tile.

    loss = per_row[:n, 0]  # (N,) ; output bytes << input bytes, so the narrow
                           # (tb, 1) writeback is negligible vs HBM input traffic.
    if reduction == "mean":
        # Final scalar mean over the batch is trivial XLA glue; the hot path
        # (log-sum-exp + class-dim reductions) lives in the kernel.
        return jnp.mean(loss)
    elif reduction == "none":
        return loss.reshape(lead_shape)
    else:
        raise NotImplementedError


def _reference(x, y, reduction="mean"):
    lp = jax.nn.log_softmax(x.astype(jnp.float32), axis=-1)
    loss = jnp.sum(-y.astype(jnp.float32) * lp, axis=-1)
    return jnp.mean(loss) if reduction == "mean" else loss


if __name__ == "__main__":
    key = jax.random.PRNGKey(0)
    k1, k2, k3, k4 = jax.random.split(key, 4)

    # Case 1: small f32 batch, classes on the lane axis.
    N, C = 8, 128
    x = jax.random.normal(k1, (N, C), dtype=jnp.float32)
    y = jax.nn.softmax(jax.random.normal(k2, (N, C), dtype=jnp.float32), axis=-1)

    out_mean = jax.block_until_ready(soft_target_cross_entropy(x, y, reduction="mean"))
    out_none = jax.block_until_ready(soft_target_cross_entropy(x, y, reduction="none"))
    assert jnp.allclose(out_mean, _reference(x, y, "mean"), atol=2e-5, rtol=2e-5)
    assert jnp.allclose(out_none, _reference(x, y, "none"), atol=2e-5, rtol=2e-5)

    # Case 2: ragged batch (not a multiple of the tile) + multi-tile grid,
    # bf16 inputs (f32 math inside the kernel).
    N2, C2 = 50, 128
    xb = jax.random.normal(k3, (N2, C2), dtype=jnp.bfloat16)
    yb = jax.nn.softmax(
        jax.random.normal(k4, (N2, C2), dtype=jnp.float32), axis=-1
    ).astype(jnp.bfloat16)

    out2_mean = jax.block_until_ready(
        soft_target_cross_entropy(xb, yb, reduction="mean", block_rows=16)
    )
    out2_none = jax.block_until_ready(
        soft_target_cross_entropy(xb, yb, reduction="none", block_rows=16)
    )
    assert jnp.allclose(out2_mean, _reference(xb, yb, "mean"), atol=2e-5, rtol=2e-5)
    assert jnp.allclose(out2_none, _reference(xb, yb, "none"), atol=2e-5, rtol=2e-5)
    assert out2_none.shape == (N2,)

    print("KERNEL_OK")
</pallas_src>

<mosaic_0001>
module attributes {stable_mosaic.version = 11 : i64} {
  func.func @_soft_target_ce_kernel(%arg0: i32, %arg1: memref<8x128xf32, #tpu.memory_space<vmem>>, %arg2: memref<8x128xf32, #tpu.memory_space<vmem>>, %arg3: memref<8x1xf32, #tpu.memory_space<vmem>>) attributes {dimension_semantics = [#tpu.dimension_semantics<parallel>], iteration_bounds = array<i64: 1>, scalar_prefetch = 0 : i64, scratch_operands = 0 : i64, tpu.core_type = #tpu.core_type<tc>, window_params = [{transform_indices = @transform_0, window_bounds = array<i64: 8, 128>}, {transform_indices = @transform_1, window_bounds = array<i64: 8, 128>}, {transform_indices = @transform_2, window_bounds = array<i64: 8, 1>}]} {
    %c0 = arith.constant 0 : index
    %c0_0 = arith.constant 0 : index
    %0 = vector.load %arg1[%c0, %c0_0] : memref<8x128xf32, #tpu.memory_space<vmem>>, vector<8x128xf32>
    %c0_1 = arith.constant 0 : index
    %c0_2 = arith.constant 0 : index
    %1 = vector.load %arg2[%c0_1, %c0_2] : memref<8x128xf32, #tpu.memory_space<vmem>>, vector<8x128xf32>
    %cst = arith.constant dense<0xFF800000> : vector<8xf32>
    %2 = vector.multi_reduction <maximumf>, %0, %cst [1] : vector<8x128xf32> to vector<8xf32>
    %3 = vector.shape_cast %2 : vector<8xf32> to vector<8x1xf32>
    %4 = vector.broadcast %3 : vector<8x1xf32> to vector<8x128xf32>
    %5 = arith.subf %0, %4 : vector<8x128xf32>
    %6 = math.exp %5 : vector<8x128xf32>
    %cst_3 = arith.constant dense<0.000000e+00> : vector<8xf32>
    %7 = vector.multi_reduction <add>, %6, %cst_3 [1] : vector<8x128xf32> to vector<8xf32>
    %8 = vector.shape_cast %7 : vector<8xf32> to vector<8x1xf32>
    %9 = math.log %8 : vector<8x1xf32>
    %cst_4 = arith.constant dense<0.000000e+00> : vector<8xf32>
    %10 = vector.multi_reduction <add>, %1, %cst_4 [1] : vector<8x128xf32> to vector<8xf32>
    %11 = vector.shape_cast %10 : vector<8xf32> to vector<8x1xf32>
    %12 = arith.mulf %1, %5 : vector<8x128xf32>
    %cst_5 = arith.constant dense<0.000000e+00> : vector<8xf32>
    %13 = vector.multi_reduction <add>, %12, %cst_5 [1] : vector<8x128xf32> to vector<8xf32>
    %14 = vector.shape_cast %13 : vector<8xf32> to vector<8x1xf32>
    %15 = arith.mulf %9, %11 : vector<8x1xf32>
    %16 = arith.subf %15, %14 : vector<8x1xf32>
    %c0_6 = arith.constant 0 : index
    %c0_7 = arith.constant 0 : index
    %17 = vector.load %arg3[%c0_6, %c0_7] : memref<8x1xf32, #tpu.memory_space<vmem>>, vector<8x1xf32>
    tpu.vector_store %arg3[%c0_6, %c0_7], %16 {strides = array<i32>} : memref<8x1xf32, #tpu.memory_space<vmem>>, vector<8x1xf32>,
    return
  }
  func.func @transform_0(%arg0: i32) -> (i32, i32) {
    %c0_i32 = arith.constant 0 : i32
    %c0_i32_0 = arith.constant 0 : i32
    return %arg0, %c0_i32 : i32, i32
  }
  func.func @transform_1(%arg0: i32) -> (i32, i32) {
    %c0_i32 = arith.constant 0 : i32
    %c0_i32_0 = arith.constant 0 : i32
    return %arg0, %c0_i32 : i32, i32
  }
  func.func @transform_2(%arg0: i32) -> (i32, i32) {
    %c0_i32 = arith.constant 0 : i32
    %c0_i32_0 = arith.constant 0 : i32
    return %arg0, %c0_i32 : i32, i32
  }
}

</mosaic_0001>

<llo_original>
// kernel: soft_target_cross_entropy.1
$region0: #{soft_target_cross_entropy.1}
  #allocation0 [shape = 'u32[]', space=smem, size = 0x4, offset = 0x4, fixed_abs, tag = 'smem constant byte address 0x4 - core index']
  #allocation1 [shape = 'u32[144,128]{1,0:T(1,128)}', space=vmem, size = 0x12000, scoped, tag = 'internal scratch']
  %s0 = inlined_call_operand.hbm [shape: f32[8,128], index: 0, kind: input, shape index: {}]
  %s1 = inlined_call_operand.hbm [shape: f32[8,128], index: 1, kind: input, shape index: {}]
  %s2 = inlined_call_operand.vmem [shape: f32[8,1], index: 2, kind: output, shape index: {}]
  %s3 = sld [smem:[#allocation0]]
  $region26: #{soft_target_cross_entropy.1} parent=0
    _
  %s5 = ssub.s32 1, %s3
  %s6 = scalar_select 0, %s5, %s3
  $region1: #{soft_target_cross_entropy.1} parent=0
    #allocation2 [shape = 'u8[4096]{0}', space=vmem, size = 0x1000, scoped, tag = 'input window, operand 0, single buffered']
    #allocation3 [shape = 's32[1]{0}', space=sflag, size = 0x4, scoped, tag = 'scoped memory for soft_target_cross_entropy.1']
    #allocation4 [shape = 'u8[4096]{0}', space=vmem, size = 0x1000, scoped, tag = 'input window, operand 1, single buffered']
    #allocation5 [shape = 's32[1]{0}', space=sflag, size = 0x4, scoped, tag = 'scoped memory for soft_target_cross_entropy.1']
    %7 = vsyncpa [#allocation3], 0
    %8 = vsyncpa [#allocation5], 0
    // Predicated region
    $region2: #{soft_target_cross_entropy.1} parent=1 // pred_check
      _
    $region3: #{soft_target_cross_entropy.1} parent=1 // pred_check_branch
      %10 = sbr.rel (0) target = $region5
    $region4: #{soft_target_cross_entropy.1} parent=1 // pred_region
      %s12 = ssub.s32 128, 128
      %13 = vsyncadd [#allocation3], %s12
      %s15 = sshll.u32 [#allocation2], 4
      %s16 = int_to_ptr.vmem [resolvable:$true] %s15
      %18 = dma.hbm_to_vmem [thread:$0]  %s0, 128, %s16, [#allocation3]
    $region5: #{soft_target_cross_entropy.1} parent=1 // pred_fallthru
      _
    // Predicated region
    $region6: #{soft_target_cross_entropy.1} parent=1 // pred_check
      _
    $region7: #{soft_target_cross_entropy.1} parent=1 // pred_check_branch
      %20 = sbr.rel (0) target = $region9
    $region8: #{soft_target_cross_entropy.1} parent=1 // pred_region
      %s22 = ssub.s32 128, 128
      %23 = vsyncadd [#allocation5], %s22
      %s25 = sshll.u32 [#allocation4], 4
      %s26 = int_to_ptr.vmem [resolvable:$true] %s25
      %28 = dma.hbm_to_vmem [thread:$0]  %s1, 128, %s26, [#allocation5]
    $region9: #{soft_target_cross_entropy.1} parent=1 // pred_fallthru
      _
    // Predicated region
    $region10: #{soft_target_cross_entropy.1} parent=1 // pred_check
      _
    $region11: #{soft_target_cross_entropy.1} parent=1 // pred_check_branch
      %30 = sbr.rel (0) target = $region13
    $region12: #{soft_target_cross_entropy.1} parent=1 // pred_region
      %31 = dma.done [#allocation3], 128
    $region13: #{soft_target_cross_entropy.1} parent=1 // pred_fallthru
      _
    // Predicated region
    $region14: #{soft_target_cross_entropy.1} parent=1 // pred_check
      _
    $region15: #{soft_target_cross_entropy.1} parent=1 // pred_check_branch
      %33 = sbr.rel (0) target = $region17
    $region16: #{soft_target_cross_entropy.1} parent=1 // pred_region
      %34 = dma.done [#allocation5], 128
    $region17: #{soft_target_cross_entropy.1} parent=1 // pred_fallthru
      _
    %v35 = vld [vmem:[#allocation2] sm:$0xff]
    %v36 = vld [vmem:[#allocation4] sm:$0xff]
    %37 = vmax.xlane.f32.xlu0 %v35
    %v38 = vpop.xlane.xlu0 %37
    %v39 = vsub.f32 %v35, %v38
    %v40 = vmul.f32 %v39, 1.442695
    %v41 = vpow.pop %v40
    %42 = vadd.xlane.f32.xlu0 %v41
    %v43 = vpop.xlane.xlu0 %42
    %v44 = vlog2.pop %v43
    %v45 = vmul.f32 %v44, 0.6931472
    %46 = vadd.xlane.f32.xlu0 %v36
    %v47 = vpop.xlane.xlu0 %46
    %v48 = vmul.f32 %v36, %v39
    %49 = vadd.xlane.f32.xlu0 %v48
    %v50 = vpop.xlane.xlu0 %49
    %v51 = vmul.f32 %v45, %v47
    %v52 = vsub.f32 %v51, %v50
    %vm53 = vcmask 7168
    %54 = vst.msk [vmem:[%s2] sm:$0xff] %vm53, %v52
    // Predicated region
    $region18: #{soft_target_cross_entropy.1} parent=1 // pred_check
      _
    $region19: #{soft_target_cross_entropy.1} parent=1 // pred_check_branch
      %56 = sbr.rel (0) target = $region21
    $region20: #{soft_target_cross_entropy.1} parent=1 // pred_region
      _
    $region21: #{soft_target_cross_entropy.1} parent=1 // pred_fallthru
      _
    // Predicated region
    $region22: #{soft_target_cross_entropy.1} parent=1 // pred_check
      _
    $region23: #{soft_target_cross_entropy.1} parent=1 // pred_check_branch
      %58 = sbr.rel (0) target = $region25
    $region24: #{soft_target_cross_entropy.1} parent=1 // pred_region
      _
    $region25: #{soft_target_cross_entropy.1} parent=1 // pred_fallthru
      _
    %59 = vsyncpa [#allocation3], 1
    %60 = vsyncpa [#allocation5], 1

</llo_original>
